<compile_context>
chip_gen: v5e
topology: v5e:2x2
jax: 0.10.0
libtpu: 0.0.40
codegen_flags: <defaults>
</compile_context>

<pallas_src>
import functools

import jax
import jax.numpy as jnp
from jax.experimental import pallas as pl
from jax.experimental.pallas import tpu as pltpu

LN_EPS = 6.1e-05


def _round_up(x, m):
    return (x + m - 1) // m * m


def _patch_embed_kernel(x_ref, w_ref, b_ref, g_ref, beta_ref, o_ref, *, eps,
                        e_valid):
    # x_ref    : (tm, Kp)  patch tile (compute dtype, e.g. bf16)
    # w_ref    : (Kp, Ep)  projection weight, K-major (compute dtype)
    # b_ref    : (1, Ep)   projection bias   (f32, zero-padded)
    # g_ref    : (1, Ep)   LayerNorm gamma   (f32, zero-padded)
    # beta_ref : (1, Ep)   LayerNorm beta    (f32, zero-padded)
    # o_ref    : (tm, Ep)  output (f32); padded rows/cols sliced off by caller
    y = jnp.dot(x_ref[...], w_ref[...], preferred_element_type=jnp.float32)
    y = y + b_ref[...]  # padded columns stay exactly 0 (w, b padded with 0)

    # --- LayerNorm over the *valid* embedding columns only (f32) ---
    inv_e = 1.0 / e_valid
    mean = jnp.sum(y, axis=-1, keepdims=True) * inv_e  # padded cols contribute 0
    centered = y - mean
    col = jax.lax.broadcasted_iota(jnp.int32, y.shape, dimension=1)
    centered_v = jnp.where(col < e_valid, centered, 0.0)
    var = jnp.sum(centered_v * centered_v, axis=-1, keepdims=True) * inv_e
    norm = centered * jax.lax.rsqrt(var + eps)
    out = norm * g_ref[...] + beta_ref[...]
    o_ref[...] = out.astype(o_ref.dtype)


def patch_embed(x_nchw, conv_w, conv_b, ln_gamma, ln_beta, patch_size, *,
                tm_max=512, compute_dtype=jnp.bfloat16):
    """PatchEmbed forward (conv-as-matmul + bias + LayerNorm, fused).

    x_nchw : (B, C, H, W)  float32
    conv_w : (E, C, p, p)  PyTorch Conv2d weight layout
    conv_b : (E,)
    ln_gamma, ln_beta : (E,)
    returns (B, Ho*Wo, E) float32
    """
    B, C, H, W = x_nchw.shape
    p = patch_size
    E = conv_w.shape[0]
    Ho, Wo = H // p, W // p
    K = C * p * p
    M = B * Ho * Wo

    # Padded problem sizes: lane-dense K and E, tile-aligned M.
    Kp = _round_up(K, 128)
    Ep = _round_up(E, 128)
    tm = min(tm_max, _round_up(M, 8))
    Mp = _round_up(M, tm)

    # ---- glue (plain JAX): patchify NCHW -> (M, K), then pad + cast ----
    # TODO(synk): fuse this transpose into the pallas_call DMA
    # (allow_input_fusion or in-kernel row-slab rearrange) to avoid the extra
    # HBM round trip of the patch matrix.
    xp = x_nchw.reshape(B, C, Ho, p, Wo, p)
    xp = xp.transpose(0, 2, 4, 1, 3, 5)              # (B, Ho, Wo, C, p, p)
    xp = xp.reshape(M, K).astype(compute_dtype)
    xp = jnp.pad(xp, ((0, Mp - M), (0, Kp - K)))

    w_kn = conv_w.reshape(E, K).T.astype(compute_dtype)        # (K, E)
    w_kn = jnp.pad(w_kn, ((0, Kp - K), (0, Ep - E)))

    b_1n = jnp.pad(conv_b.astype(jnp.float32), (0, Ep - E)).reshape(1, Ep)
    g_1n = jnp.pad(ln_gamma.astype(jnp.float32), (0, Ep - E)).reshape(1, Ep)
    beta_1n = jnp.pad(ln_beta.astype(jnp.float32), (0, Ep - E)).reshape(1, Ep)

    kernel = functools.partial(_patch_embed_kernel, eps=LN_EPS, e_valid=E)

    itemsize = jnp.dtype(compute_dtype).itemsize
    cost = pl.CostEstimate(
        flops=2 * Mp * Kp * Ep,
        transcendentals=Mp,  # one rsqrt per row
        bytes_accessed=(Mp * Kp * itemsize + Kp * Ep * itemsize
                        + Mp * Ep * 4 + 3 * Ep * 4),
    )

    out = pl.pallas_call(
        kernel,
        out_shape=jax.ShapeDtypeStruct((Mp, Ep), jnp.float32),
        grid=(Mp // tm,),
        in_specs=[
            pl.BlockSpec((tm, Kp), lambda i: (i, 0)),   # patch tile (streamed)
            pl.BlockSpec((Kp, Ep), lambda i: (0, 0)),   # weight (resident)
            pl.BlockSpec((1, Ep), lambda i: (0, 0)),    # bias
            pl.BlockSpec((1, Ep), lambda i: (0, 0)),    # gamma
            pl.BlockSpec((1, Ep), lambda i: (0, 0)),    # beta
        ],
        out_specs=pl.BlockSpec((tm, Ep), lambda i: (i, 0)),
        compiler_params=pltpu.CompilerParams(
            dimension_semantics=("parallel",)),
        cost_estimate=cost,
    )(xp, w_kn, b_1n, g_1n, beta_1n)

    out = out[:M, :E]                                  # drop row/lane padding
    return out.reshape(B, Ho * Wo, E)


def _reference(x_nchw, conv_w, conv_b, ln_gamma, ln_beta, patch_size, *,
               compute_dtype=jnp.bfloat16):
    """Pure-JAX reference matching the PyTorch module (same compute dtype)."""
    B, C, H, W = x_nchw.shape
    p = patch_size
    E = conv_w.shape[0]
    y = jax.lax.conv_general_dilated(
        x_nchw.astype(compute_dtype), conv_w.astype(compute_dtype),
        window_strides=(p, p), padding="VALID",
        dimension_numbers=("NCHW", "OIHW", "NCHW"),
        preferred_element_type=jnp.float32)
    y = y + conv_b.reshape(1, E, 1, 1).astype(jnp.float32)
    y = y.reshape(B, E, -1).transpose(0, 2, 1)         # (B, Ho*Wo, E)
    mean = jnp.mean(y, axis=-1, keepdims=True)
    var = jnp.mean((y - mean) ** 2, axis=-1, keepdims=True)
    y = (y - mean) / jnp.sqrt(var + LN_EPS)
    return y * ln_gamma.astype(jnp.float32) + ln_beta.astype(jnp.float32)


if __name__ == "__main__":
    # Small shapes: B=2, C=4, H=W=16, patch=4 -> Ho=Wo=4, 32 patches, E=32
    B, C, H, W = 2, 4, 16, 16
    patch_size = 4
    E = 32

    key = jax.random.PRNGKey(0)
    k_x, k_w, k_b, k_g, k_be = jax.random.split(key, 5)

    x = jax.random.normal(k_x, (B, C, H, W), dtype=jnp.float32)
    conv_w = 0.05 * jax.random.normal(k_w, (E, C, patch_size, patch_size),
                                      dtype=jnp.float32)
    conv_b = 0.01 * jax.random.normal(k_b, (E,), dtype=jnp.float32)
    ln_gamma = jnp.ones((E,), dtype=jnp.float32) + \
        0.01 * jax.random.normal(k_g, (E,), dtype=jnp.float32)
    ln_beta = 0.01 * jax.random.normal(k_be, (E,), dtype=jnp.float32)

    out = patch_embed(x, conv_w, conv_b, ln_gamma, ln_beta, patch_size)
    out = jax.block_until_ready(out)

    ref = _reference(x, conv_w, conv_b, ln_gamma, ln_beta, patch_size)
    assert out.shape == (B, (H // patch_size) * (W // patch_size), E)
    assert out.dtype == jnp.float32
    assert jnp.allclose(out, ref, atol=2e-3, rtol=2e-3), "mismatch vs reference"

    print("KERNEL_OK")
</pallas_src>

<mosaic_0001>
module attributes {stable_mosaic.version = 11 : i64} {
  func.func @_patch_embed_kernel(%arg0: i32, %arg1: memref<32x128xbf16, #tpu.memory_space<vmem>>, %arg2: memref<128x128xbf16, #tpu.memory_space<vmem>>, %arg3: memref<1x128xf32, #tpu.memory_space<vmem>>, %arg4: memref<1x128xf32, #tpu.memory_space<vmem>>, %arg5: memref<1x128xf32, #tpu.memory_space<vmem>>, %arg6: memref<32x128xf32, #tpu.memory_space<vmem>>) attributes {dimension_semantics = [#tpu.dimension_semantics<parallel>], iteration_bounds = array<i64: 1>, scalar_prefetch = 0 : i64, scratch_operands = 0 : i64, tpu.core_type = #tpu.core_type<tc>, window_params = [{transform_indices = @transform_0, window_bounds = array<i64: 32, 128>}, {pipeline_mode = #tpu.pipeline_mode<synchronous>, transform_indices = @transform_1, window_bounds = array<i64: 128, 128>}, {pipeline_mode = #tpu.pipeline_mode<synchronous>, transform_indices = @transform_2, window_bounds = array<i64: 1, 128>}, {pipeline_mode = #tpu.pipeline_mode<synchronous>, transform_indices = @transform_3, window_bounds = array<i64: 1, 128>}, {pipeline_mode = #tpu.pipeline_mode<synchronous>, transform_indices = @transform_4, window_bounds = array<i64: 1, 128>}, {transform_indices = @transform_5, window_bounds = array<i64: 32, 128>}]} {
    %c0 = arith.constant 0 : index
    %c0_0 = arith.constant 0 : index
    %0 = vector.load %arg1[%c0, %c0_0] : memref<32x128xbf16, #tpu.memory_space<vmem>>, vector<32x128xbf16>
    %c0_1 = arith.constant 0 : index
    %c0_2 = arith.constant 0 : index
    %1 = vector.load %arg2[%c0_1, %c0_2] : memref<128x128xbf16, #tpu.memory_space<vmem>>, vector<128x128xbf16>
    %cst = arith.constant dense<0.000000e+00> : vector<32x128xf32>
    %2 = tpu.matmul %0, %1, %cst {dimension_numbers = #tpu.dot_dimension_numbers<[1], [0], [0], [1], [0, 0, 1, 1], [], []>} : vector<32x128xbf16>, vector<128x128xbf16>, vector<32x128xf32> -> vector<32x128xf32>
    %c0_3 = arith.constant 0 : index
    %c0_4 = arith.constant 0 : index
    %3 = vector.load %arg3[%c0_3, %c0_4] : memref<1x128xf32, #tpu.memory_space<vmem>>, vector<1x128xf32>
    %4 = vector.broadcast %3 : vector<1x128xf32> to vector<32x128xf32>
    %5 = arith.addf %2, %4 : vector<32x128xf32>
    %cst_5 = arith.constant dense<0.000000e+00> : vector<32xf32>
    %6 = vector.multi_reduction <add>, %5, %cst_5 [1] : vector<32x128xf32> to vector<32xf32>
    %7 = vector.shape_cast %6 : vector<32xf32> to vector<32x1xf32>
    %cst_6 = arith.constant 3.125000e-02 : f32
    %8 = vector.broadcast %cst_6 : f32 to vector<32x1xf32>
    %9 = arith.mulf %7, %8 : vector<32x1xf32>
    %10 = vector.broadcast %9 : vector<32x1xf32> to vector<32x128xf32>
    %11 = arith.subf %5, %10 : vector<32x128xf32>
    %12 = tpu.iota {dimensions = array<i32: 1>} : vector<32x128xi32>
    %c32_i32 = arith.constant 32 : i32
    %13 = vector.broadcast %c32_i32 : i32 to vector<32x128xi32>
    %14 = arith.cmpi slt, %12, %13 : vector<32x128xi32>
    %cst_7 = arith.constant 0.000000e+00 : f32
    %15 = vector.broadcast %cst_7 : f32 to vector<32x128xf32>
    %16 = arith.select %14, %11, %15 : vector<32x128xi1>, vector<32x128xf32>
    %17 = arith.mulf %16, %16 : vector<32x128xf32>
    %cst_8 = arith.constant dense<0.000000e+00> : vector<32xf32>
    %18 = vector.multi_reduction <add>, %17, %cst_8 [1] : vector<32x128xf32> to vector<32xf32>
    %19 = vector.shape_cast %18 : vector<32xf32> to vector<32x1xf32>
    %cst_9 = arith.constant 3.125000e-02 : f32
    %20 = vector.broadcast %cst_9 : f32 to vector<32x1xf32>
    %21 = arith.mulf %19, %20 : vector<32x1xf32>
    %cst_10 = arith.constant 6.100000e-05 : f32
    %22 = vector.broadcast %cst_10 : f32 to vector<32x1xf32>
    %23 = arith.addf %21, %22 : vector<32x1xf32>
    %24 = math.rsqrt %23 : vector<32x1xf32>
    %25 = vector.broadcast %24 : vector<32x1xf32> to vector<32x128xf32>
    %26 = arith.mulf %11, %25 : vector<32x128xf32>
    %c0_11 = arith.constant 0 : index
    %c0_12 = arith.constant 0 : index
    %27 = vector.load %arg4[%c0_11, %c0_12] : memref<1x128xf32, #tpu.memory_space<vmem>>, vector<1x128xf32>
    %28 = vector.broadcast %27 : vector<1x128xf32> to vector<32x128xf32>
    %29 = arith.mulf %26, %28 : vector<32x128xf32>
    %c0_13 = arith.constant 0 : index
    %c0_14 = arith.constant 0 : index
    %30 = vector.load %arg5[%c0_13, %c0_14] : memref<1x128xf32, #tpu.memory_space<vmem>>, vector<1x128xf32>
    %31 = vector.broadcast %30 : vector<1x128xf32> to vector<32x128xf32>
    %32 = arith.addf %29, %31 : vector<32x128xf32>
    %c0_15 = arith.constant 0 : index
    %c0_16 = arith.constant 0 : index
    %33 = vector.load %arg6[%c0_15, %c0_16] : memref<32x128xf32, #tpu.memory_space<vmem>>, vector<32x128xf32>
    tpu.vector_store %arg6[%c0_15, %c0_16], %32 {strides = array<i32>} : memref<32x128xf32, #tpu.memory_space<vmem>>, vector<32x128xf32>,
    return
  }
  func.func @transform_0(%arg0: i32) -> (i32, i32) {
    %c0_i32 = arith.constant 0 : i32
    %c0_i32_0 = arith.constant 0 : i32
    return %arg0, %c0_i32 : i32, i32
  }
  func.func @transform_1(%arg0: i32) -> (i32, i32) {
    %c0_i32 = arith.constant 0 : i32
    %c0_i32_0 = arith.constant 0 : i32
    %c0_i32_1 = arith.constant 0 : i32
    return %c0_i32, %c0_i32_0 : i32, i32
  }
  func.func @transform_2(%arg0: i32) -> (i32, i32) {
    %c0_i32 = arith.constant 0 : i32
    %c0_i32_0 = arith.constant 0 : i32
    %c0_i32_1 = arith.constant 0 : i32
    return %c0_i32, %c0_i32_0 : i32, i32
  }
  func.func @transform_3(%arg0: i32) -> (i32, i32) {
    %c0_i32 = arith.constant 0 : i32
    %c0_i32_0 = arith.constant 0 : i32
    %c0_i32_1 = arith.constant 0 : i32
    return %c0_i32, %c0_i32_0 : i32, i32
  }
  func.func @transform_4(%arg0: i32) -> (i32, i32) {
    %c0_i32 = arith.constant 0 : i32
    %c0_i32_0 = arith.constant 0 : i32
    %c0_i32_1 = arith.constant 0 : i32
    return %c0_i32, %c0_i32_0 : i32, i32
  }
  func.func @transform_5(%arg0: i32) -> (i32, i32) {
    %c0_i32 = arith.constant 0 : i32
    %c0_i32_0 = arith.constant 0 : i32
    return %arg0, %c0_i32 : i32, i32
  }
}

</mosaic_0001>

<llo_original>
// kernel: tpu_custom_call.1
$region0: #{tpu_custom_call.1}
  #allocation0 [shape = 'u32[]', space=smem, size = 0x4, offset = 0x4, fixed_abs, tag = 'smem constant byte address 0x4 - core index']
  #allocation1 [shape = 'u32[72,128]{1,0:T(1,128)}', space=vmem, size = 0x9000, scoped, tag = 'internal scratch']
  %s0 = inlined_call_operand.hbm [shape: bf16[32,128], index: 0, kind: input, shape index: {}]
  %s1 = inlined_call_operand.hbm [shape: bf16[128,128], index: 1, kind: input, shape index: {}]
  %s2 = inlined_call_operand.vmem [shape: f32[1,128], index: 2, kind: input, shape index: {}]
  %s3 = inlined_call_operand.vmem [shape: f32[1,128], index: 3, kind: input, shape index: {}]
  %s4 = inlined_call_operand.vmem [shape: f32[1,128], index: 4, kind: input, shape index: {}]
  %s5 = inlined_call_operand.hbm [shape: f32[32,128], index: 5, kind: output, shape index: {}]
  %s6 = sld [smem:[#allocation0]]
  $region38: #{tpu_custom_call.1} parent=0
    _
  %s8 = ssub.s32 1, %s6
  %s9 = scalar_select 0, %s8, %s6
  $region1: #{tpu_custom_call.1} parent=0
    #allocation2 [shape = 'u8[8192]{0}', space=vmem, size = 0x2000, scoped, tag = 'input window, operand 0, single buffered']
    #allocation3 [shape = 's32[1]{0}', space=sflag, size = 0x4, scoped, tag = 'scoped memory for tpu_custom_call.1']
    #allocation4 [shape = 's32[1]{0}', space=sflag, size = 0x4, scoped, tag = 'scoped memory for tpu_custom_call.1']
    #allocation5 [shape = 'u8[32768]{0}', space=vmem, size = 0x8000, scoped, tag = 'input window, operand 1, single buffered']
    #allocation6 [shape = 's32[1]{0}', space=sflag, size = 0x4, scoped, tag = 'scoped memory for tpu_custom_call.1']
    #allocation7 [shape = 'u8[16384]{0}', space=vmem, size = 0x4000, scoped, tag = 'output window, operand 0, single buffered']
    %10 = vsyncpa [#allocation3], 0
    %11 = vsyncpa [#allocation6], 0
    %12 = vsyncpa [#allocation4], 0
    // Predicated region
    $region2: #{tpu_custom_call.1} parent=1 // pred_check
      _
    $region3: #{tpu_custom_call.1} parent=1 // pred_check_branch
      %14 = sbr.rel (0) target = $region5
    $region4: #{tpu_custom_call.1} parent=1 // pred_region
      %16 = vsyncadd [#allocation3], 0
      %s17 = sshll.u32 %s0, 4
      %s18 = int_to_ptr.hbm [resolvable:$true] %s17
      %s19 = sshll.u32 [#allocation2], 4
      %s20 = int_to_ptr.vmem [resolvable:$true] %s19
      %25 = dma.hbm_to_vmem [thread:$0]  %s18, 256, %s20, [#allocation3], 64, 64, 4
    $region5: #{tpu_custom_call.1} parent=1 // pred_fallthru
      _
    // Predicated region
    $region6: #{tpu_custom_call.1} parent=1 // pred_check
      _
    $region7: #{tpu_custom_call.1} parent=1 // pred_check_branch
      %27 = sbr.rel (0) target = $region9
    $region8: #{tpu_custom_call.1} parent=1 // pred_region
      %29 = vsyncadd [#allocation6], 0
      %s30 = sshll.u32 %s1, 4
      %s31 = int_to_ptr.hbm [resolvable:$true] %s30
      %s32 = sshll.u32 [#allocation5], 4
      %s33 = int_to_ptr.vmem [resolvable:$true] %s32
      %38 = dma.hbm_to_vmem [thread:$0]  %s31, 1024, %s33, [#allocation6], 64, 64, 4
    $region9: #{tpu_custom_call.1} parent=1 // pred_fallthru
      _
    // Predicated region
    $region10: #{tpu_custom_call.1} parent=1 // pred_check
      _
    $region11: #{tpu_custom_call.1} parent=1 // pred_check_branch
      %40 = sbr.rel (0) target = $region13
    $region12: #{tpu_custom_call.1} parent=1 // pred_region
      _
    $region13: #{tpu_custom_call.1} parent=1 // pred_fallthru
      _
    // Predicated region
    $region14: #{tpu_custom_call.1} parent=1 // pred_check
      _
    $region15: #{tpu_custom_call.1} parent=1 // pred_check_branch
      %42 = sbr.rel (0) target = $region17
    $region16: #{tpu_custom_call.1} parent=1 // pred_region
      _
    $region17: #{tpu_custom_call.1} parent=1 // pred_fallthru
      _
    // Predicated region
    $region18: #{tpu_custom_call.1} parent=1 // pred_check
      _
    $region19: #{tpu_custom_call.1} parent=1 // pred_check_branch
      %44 = sbr.rel (0) target = $region21
    $region20: #{tpu_custom_call.1} parent=1 // pred_region
      _
    $region21: #{tpu_custom_call.1} parent=1 // pred_fallthru
      _
    // Predicated region
    $region22: #{tpu_custom_call.1} parent=1 // pred_check
      _
    $region23: #{tpu_custom_call.1} parent=1 // pred_check_branch
      %46 = sbr.rel (0) target = $region25
    $region24: #{tpu_custom_call.1} parent=1 // pred_region
      %48 = dma.done [#allocation3], 256
    $region25: #{tpu_custom_call.1} parent=1 // pred_fallthru
      _
    // Predicated region
    $region26: #{tpu_custom_call.1} parent=1 // pred_check
      _
    $region27: #{tpu_custom_call.1} parent=1 // pred_check_branch
      %50 = sbr.rel (0) target = $region29
    $region28: #{tpu_custom_call.1} parent=1 // pred_region
      %52 = dma.done [#allocation6], 1024
    $region29: #{tpu_custom_call.1} parent=1 // pred_fallthru
      _
    %v53 = vld [vmem:[#allocation2] sm:$0xf]
    %v54 = vld [vmem:[#allocation2 + $0x4] sm:$0xf]
    %v55 = vld [vmem:[#allocation2 + $0x8] sm:$0xf]
    %v56 = vld [vmem:[#allocation2 + $0xc] sm:$0xf]
    %v57 = vld [vmem:[#allocation5] sm:$0xf]
    %v58 = vld [vmem:[#allocation5 + $0x4] sm:$0xf]
    %v59 = vld [vmem:[#allocation5 + $0x8] sm:$0xf]
    %v60 = vld [vmem:[#allocation5 + $0xc] sm:$0xf]
    %v61 = vld [vmem:[#allocation5 + $0x10] sm:$0xf]
    %v62 = vld [vmem:[#allocation5 + $0x14] sm:$0xf]
    %v63 = vld [vmem:[#allocation5 + $0x18] sm:$0xf]
    %v64 = vld [vmem:[#allocation5 + $0x1c] sm:$0xf]
    %v65 = vld [vmem:[#allocation5 + $0x20] sm:$0xf]
    %v66 = vld [vmem:[#allocation5 + $0x24] sm:$0xf]
    %v67 = vld [vmem:[#allocation5 + $0x28] sm:$0xf]
    %v68 = vld [vmem:[#allocation5 + $0x2c] sm:$0xf]
    %v69 = vld [vmem:[#allocation5 + $0x30] sm:$0xf]
    %v70 = vld [vmem:[#allocation5 + $0x34] sm:$0xf]
    %v71 = vld [vmem:[#allocation5 + $0x38] sm:$0xf]
    %v72 = vld [vmem:[#allocation5 + $0x3c] sm:$0xf]
    %v73 = vld [vmem:[%s2] sm:$0x1]
    %v75 = vperm.slane %v73, 0
    %v81 = vunpack.c.l.b16 %v53
    %v82 = vunpack.c.l.b16 %v54
    %v83 = vunpack.c.l.b16 %v55
    %v84 = vunpack.c.l.b16 %v56
    %v85 = vpack.c.b16 %v82, %v81
    %v86 = vpack.c.b16 %v84, %v83
    %v105 = vunpack.c.l.b16 %v57
    %v106 = vunpack.c.l.b16 %v58
    %v107 = vunpack.c.l.b16 %v59
    %v108 = vunpack.c.l.b16 %v60
    %v109 = vunpack.c.l.b16 %v61
    %v110 = vunpack.c.l.b16 %v62
    %v111 = vunpack.c.l.b16 %v63
    %v112 = vunpack.c.l.b16 %v64
    %v113 = vunpack.c.l.b16 %v65
    %v114 = vunpack.c.l.b16 %v66
    %v115 = vunpack.c.l.b16 %v67
    %v116 = vunpack.c.l.b16 %v68
    %v117 = vunpack.c.l.b16 %v69
    %v118 = vunpack.c.l.b16 %v70
    %v119 = vunpack.c.l.b16 %v71
    %v120 = vunpack.c.l.b16 %v72
    %v121 = vpack.c.b16 %v106, %v105
    %v122 = vpack.c.b16 %v108, %v107
    %v123 = vpack.c.b16 %v110, %v109
    %v124 = vpack.c.b16 %v112, %v111
    %v125 = vpack.c.b16 %v114, %v113
    %v126 = vpack.c.b16 %v116, %v115
    %v127 = vpack.c.b16 %v118, %v117
    %v128 = vpack.c.b16 %v120, %v119
    %137 = vmatpush.bf16.msra.mxu0 %v128
    %138 = vmatpush.bf16.msra.mxu0 %v127
    %139 = vmatpush.bf16.msra.mxu0 %v126
    %140 = vmatpush.bf16.msra.mxu0 %v125
    %141 = vmatpush.bf16.msra.mxu0 %v124
    %142 = vmatpush.bf16.msra.mxu0 %v123
    %143 = vmatpush.bf16.msra.mxu0 %v122
    %144 = vmatpush.bf16.msra.mxu0 %v121
    %145 = vmatmul.bf16.gmra.mxu0 %v85
    %v146 = vpop.f32.mrf.mxu0
    %v147 = vadd.f32 %v75, %v146
    %v148 = vpop.f32.mrf.mxu0
    %v149 = vadd.f32 %v75, %v148
    %150 = vmatmul.bf16.gmra.mxu0 %v86
    %v151 = vpop.f32.mrf.mxu0
    %v152 = vadd.f32 %v75, %v151
    %v153 = vpop.f32.mrf.mxu0
    %v154 = vadd.f32 %v75, %v153
    %155 = vdwg.mxu0
    %156 = vadd.xlane.f32.xlu0 %v147
    %v157 = vpop.xlane.xlu0 %156
    %158 = vadd.xlane.f32.xlu0 %v149
    %v159 = vpop.xlane.xlu0 %158
    %160 = vadd.xlane.f32.xlu0 %v152
    %v161 = vpop.xlane.xlu0 %160
    %162 = vadd.xlane.f32.xlu0 %v154
    %v163 = vpop.xlane.xlu0 %162
    %v164 = vmul.f32 %v157, 0.03125
    %v165 = vmul.f32 %v159, 0.03125
    %v166 = vmul.f32 %v161, 0.03125
    %v167 = vmul.f32 %v163, 0.03125
    %v168 = vsub.f32 %v147, %v164
    %v169 = vsub.f32 %v149, %v165
    %v170 = vsub.f32 %v152, %v166
    %v171 = vsub.f32 %v154, %v167
    %v172 = vlaneseq
    %v173 = vand.u32 %v172, 127
    %vm174 = vcmp.lt.s32.totalorder %v173, 32
    %v175 = vsel %vm174, %v168, 0.0
    %v176 = vsel %vm174, %v169, 0.0
    %v177 = vsel %vm174, %v170, 0.0
    %v178 = vsel %vm174, %v171, 0.0
    %v179 = vmul.f32 %v175, %v175
    %v180 = vmul.f32 %v176, %v176
    %v181 = vmul.f32 %v177, %v177
    %v182 = vmul.f32 %v178, %v178
    %183 = vadd.xlane.f32.xlu0 %v179
    %v184 = vpop.xlane.xlu0 %183
    %185 = vadd.xlane.f32.xlu0 %v180
    %v186 = vpop.xlane.xlu0 %185
    %187 = vadd.xlane.f32.xlu0 %v181
    %v188 = vpop.xlane.xlu0 %187
    %189 = vadd.xlane.f32.xlu0 %v182
    %v190 = vpop.xlane.xlu0 %189
    %v191 = vmul.f32 %v184, 0.03125
    %v192 = vmul.f32 %v186, 0.03125
    %v193 = vmul.f32 %v188, 0.03125
    %v194 = vmul.f32 %v190, 0.03125
    %v195 = vadd.f32 %v191, 6.1e-05
    %v196 = vadd.f32 %v192, 6.1e-05
    %v197 = vadd.f32 %v193, 6.1e-05
    %v198 = vadd.f32 %v194, 6.1e-05
    %v199 = vrsqrt.pop %v195
    %v200 = vmul.f32 %v199, %v195
    %v201 = vmul.f32 %v200, %v199
    %v202 = vmul.f32 0.5, %v201
    %v203 = vsub.f32 1.5, %v202
    %v204 = vmul.f32 %v199, %v203
    %vm205 = vweird.f32 %v195
    %vm206 = vweird.f32 %v199
    %vm207 = vmor %vm205, %vm206
    %v208 = vsel %vm207, %v199, %v204
    %v209 = vrsqrt.pop %v196
    %v210 = vmul.f32 %v209, %v196
    %v211 = vmul.f32 %v210, %v209
    %v212 = vmul.f32 0.5, %v211
    %v213 = vsub.f32 1.5, %v212
    %v214 = vmul.f32 %v209, %v213
    %vm215 = vweird.f32 %v196
    %vm216 = vweird.f32 %v209
    %vm217 = vmor %vm215, %vm216
    %v218 = vsel %vm217, %v209, %v214
    %v219 = vrsqrt.pop %v197
    %v220 = vmul.f32 %v219, %v197
    %v221 = vmul.f32 %v220, %v219
    %v222 = vmul.f32 0.5, %v221
    %v223 = vsub.f32 1.5, %v222
    %v224 = vmul.f32 %v219, %v223
    %vm225 = vweird.f32 %v197
    %vm226 = vweird.f32 %v219
    %vm227 = vmor %vm225, %vm226
    %v228 = vsel %vm227, %v219, %v224
    %v229 = vrsqrt.pop %v198
    %v230 = vmul.f32 %v229, %v198
    %v231 = vmul.f32 %v230, %v229
    %v232 = vmul.f32 0.5, %v231
    %v233 = vsub.f32 1.5, %v232
    %v234 = vmul.f32 %v229, %v233
    %vm235 = vweird.f32 %v198
    %vm236 = vweird.f32 %v229
    %vm237 = vmor %vm235, %vm236
    %v238 = vsel %vm237, %v229, %v234
    %v239 = vmul.f32 %v168, %v208
    %v240 = vmul.f32 %v169, %v218
    %v241 = vmul.f32 %v170, %v228
    %v242 = vmul.f32 %v171, %v238
    %v243 = vld [vmem:[%s3] sm:$0x1]
    %v245 = vperm.slane %v243, 0
    %v247 = vmul.f32 %v239, %v245
    %v248 = vmul.f32 %v240, %v245
    %v249 = vmul.f32 %v241, %v245
    %v250 = vmul.f32 %v242, %v245
    %v251 = vld [vmem:[%s4] sm:$0x1]
    %v253 = vperm.slane %v251, 0
    %v255 = vadd.f32 %v247, %v253
    %v256 = vadd.f32 %v248, %v253
    %v257 = vadd.f32 %v249, %v253
    %v258 = vadd.f32 %v250, %v253
    %259 = vst [vmem:[#allocation7] sm:$0xff] %v255
    %260 = vst [vmem:[#allocation7 + $0x8] sm:$0xff] %v256
    %261 = vst [vmem:[#allocation7 + $0x10] sm:$0xff] %v257
    %262 = vst [vmem:[#allocation7 + $0x18] sm:$0xff] %v258
    // Predicated region
    $region30: #{tpu_custom_call.1} parent=1 // pred_check
      _
    $region31: #{tpu_custom_call.1} parent=1 // pred_check_branch
      %264 = sbr.rel (0) target = $region33
    $region32: #{tpu_custom_call.1} parent=1 // pred_region
      %266 = vsyncadd [#allocation4], 0
      %s267 = sshll.u32 [#allocation7], 4
      %s268 = int_to_ptr.vmem [resolvable:$true] %s267
      %s269 = sshll.u32 %s5, 4
      %s270 = int_to_ptr.hbm [resolvable:$true] %s269
      %275 = dma.vmem_to_hbm [thread:$0]  %s268, 512, %s270, [#allocation4], 128, 128, 8
    $region33: #{tpu_custom_call.1} parent=1 // pred_fallthru
      _
    // Predicated region
    $region34: #{tpu_custom_call.1} parent=1 // pred_check
      _
    $region35: #{tpu_custom_call.1} parent=1 // pred_check_branch
      %277 = sbr.rel (0) target = $region37
    $region36: #{tpu_custom_call.1} parent=1 // pred_region
      %279 = dma.done [#allocation4], 512
    $region37: #{tpu_custom_call.1} parent=1 // pred_fallthru
      _
    %280 = vsyncpa [#allocation3], 1
    %281 = vsyncpa [#allocation6], 1
    %282 = vsyncpa [#allocation4], 1

</llo_original>
